<compile_context>
chip_gen: v5e
topology: v5e:2x2
jax: 0.10.0
libtpu: 0.0.40
codegen_flags: <defaults>
</compile_context>

<pallas_src>
import functools

import jax
import jax.numpy as jnp
from jax.experimental import pallas as pl
from jax.experimental.pallas import tpu as pltpu


# ---------------------------------------------------------------------------
# Kernel
# ---------------------------------------------------------------------------
def _grouped_pointwise_kernel(x_ref, w1_ref, b1_ref, w2_ref, b2_ref, o_ref,
                              *, nb, acc_dtype):
    """One (nb, Cin, tn) block -> (nb, Cout, tn): y = W2 @ relu(W1 @ x + b1) + b2."""
    # x_ref: (nb, Cin, tn)  w1_ref: (Hc_pad, Cin)  b1_ref: (Hc_pad, 1)
    # w2_ref: (Cout, Hc_pad)  b2_ref: (Cout, 1)  o_ref: (nb, Cout, tn)
    for i in range(nb):                                   # nb tiny & static: unrolled
        x = x_ref[i].astype(w1_ref.dtype)                 # in-kernel cast (bf16 path)
        h = jnp.dot(w1_ref[...], x, preferred_element_type=acc_dtype)
        h = jnp.maximum(h + b1_ref[...], 0.0)             # bias + ReLU in acc dtype
        y = jnp.dot(w2_ref[...], h.astype(w2_ref.dtype),
                    preferred_element_type=jnp.float32)
        o_ref[i] = (y + b2_ref[...]).astype(o_ref.dtype)


# ---------------------------------------------------------------------------
# Weight preparation
# ---------------------------------------------------------------------------
def _grouped_1x1_to_dense_T(w, groups, out_pad=None, in_pad=None):
    """Conv2d weight (Cout, Cin//g, 1, 1) -> dense transposed (Cout[_pad], Cin[_pad])
    block-diagonal matrix M with y = M @ x reproducing the grouped 1x1 conv on
    channels-major columns.  Single vectorized einsum (no per-group update loop)."""
    cout, cin_pg = w.shape[0], w.shape[1]
    cout_pg = cout // groups
    cin = cin_pg * groups
    wg = w[:, :, 0, 0].reshape(groups, cout_pg, cin_pg)          # (g, o, c)
    eye = jnp.eye(groups, dtype=w.dtype)
    # dense[g*cout_pg + o, h*cin_pg + c] = wg[g, o, c] * delta(g, h)
    dense = jnp.einsum("goc,gh->gohc", wg, eye).reshape(cout, cin)
    if in_pad is not None and in_pad > cin:
        dense = jnp.pad(dense, ((0, 0), (0, in_pad - cin)))
    if out_pad is not None and out_pad > cout:
        dense = jnp.pad(dense, ((0, out_pad - cout), (0, 0)))
    return dense


# ---------------------------------------------------------------------------
# Hardware-aware planning (all static / trace-time Python)
# ---------------------------------------------------------------------------
def _tpu_generation():
    kind = ""
    try:
        dev = jax.devices()[0]
        if dev.platform == "tpu":
            kind = dev.device_kind.lower()
    except Exception:
        pass
    is_lite = ("lite" in kind) or ("v5e" in kind) or ("v6e" in kind)
    multi_tc = ("v7" in kind) or ("v4" in kind) or ("v5p" in kind) or \
               ("v5" in kind and not is_lite)
    old_vpu = any(g in kind for g in ("v2", "v3", "v4", "v5"))   # no bf16 VALU
    # Per-TensorCore VMEM: 64 MiB on v7x; be conservative (64 MiB) if unknown.
    vmem_cap = (128 << 20) if (kind and "v7" not in kind) else (64 << 20)
    return multi_tc, old_vpu, vmem_cap


def _plan(B, HW_pad, Cin, Cout, Hc_pad, x_isz, c_isz, a_isz, multi_tc, vmem_cap):
    """Pick (nb batches per step, spatial tile tn, vmem_limit_bytes)."""
    const_bytes = 2 * ((Hc_pad * Cin + Cout * Hc_pad) * c_isz
                       + Hc_pad * a_isz + Cout * 4)              # double-buffered consts
    budget = int(0.70 * vmem_cap) - const_bytes

    def step_bytes(nb, tn):
        io = 2 * nb * tn * (Cin + Cout) * x_isz                  # double-buffered tiles
        tmp = nb * tn * (Cin * c_isz + Hc_pad * (a_isz + c_isz) + Cout * 4)
        return io + tmp

    cap = 4096 if multi_tc else 8192
    m = HW_pad // 128
    tiles = sorted((128 * d for d in range(1, m + 1) if m % d == 0), reverse=True)
    feasible = [t for t in tiles if t <= cap and step_bytes(1, t) <= budget] or [128]

    tn = feasible[0]                                             # largest feasible tile
    if multi_tc:                                                 # keep >= 2 parallel steps
        for t in feasible:
            if B * (HW_pad // t) >= 2:
                tn = t
                break

    nb = 1
    if HW_pad // tn == 1:                                        # fold batches into a step
        max_nb = B if not multi_tc else max(B // 2, 1)
        for cand in range(max_nb, 0, -1):
            if B % cand == 0 and step_bytes(cand, tn) <= budget:
                nb = cand
                break

    vmem_limit = int(min(vmem_cap,
                         max(step_bytes(nb, tn) + const_bytes + (8 << 20), 32 << 20)))
    return nb, tn, vmem_limit


# ---------------------------------------------------------------------------
# Public op
# ---------------------------------------------------------------------------
@functools.partial(jax.jit, static_argnames=("groups", "compute_dtype"))
def convolution_op(x, w1, b1, w2, b2, *, groups=12, compute_dtype=jnp.bfloat16):
    """x: (B, Cin, H, W) -> (B, Cout, H, W), same semantics as the PyTorch module."""
    B, Cin, H, W = x.shape
    Hc = w1.shape[0]
    Cout = w2.shape[0]
    HW = H * W
    HW_pad = ((HW + 127) // 128) * 128

    multi_tc, old_vpu, vmem_cap = _tpu_generation()

    compute_dtype = jnp.dtype(compute_dtype)
    # bf16 bias+ReLU epilogue on bf16-native VPUs (v6e/v7x); f32 elsewhere / exact path.
    acc_dtype = compute_dtype if (compute_dtype == jnp.bfloat16 and not old_vpu) \
        else jnp.dtype(jnp.float32)

    # Pad hidden dim 96 -> 128 for full (8,128) vregs / clean MXU K; padded rows carry
    # zero weights + zero bias, so relu(0) = 0 contributes nothing.
    Hc_pad = ((Hc + 127) // 128) * 128

    w1t = _grouped_1x1_to_dense_T(w1, groups, out_pad=Hc_pad).astype(compute_dtype)
    w2t = _grouped_1x1_to_dense_T(w2, groups, in_pad=Hc_pad).astype(compute_dtype)
    b1_col = jnp.pad(b1, (0, Hc_pad - Hc)).reshape(Hc_pad, 1).astype(acc_dtype)
    b2_col = b2.reshape(Cout, 1).astype(jnp.float32)

    # Channels-major, spatial on lanes: a free contiguous reshape (NO transpose).
    x_cm = x.reshape(B, Cin, HW)
    if HW_pad != HW:
        # Ragged spatial extent: pad to a lane multiple so stores stay lane-dense
        # and the tile footprint stays bounded; sliced off after the kernel.
        x_cm = jnp.pad(x_cm, ((0, 0), (0, 0), (0, HW_pad - HW)))

    x_isz = jnp.dtype(x.dtype).itemsize
    c_isz = compute_dtype.itemsize
    a_isz = acc_dtype.itemsize
    nb, tn, vmem_limit = _plan(B, HW_pad, Cin, Cout, Hc_pad,
                               x_isz, c_isz, a_isz, multi_tc, vmem_cap)
    grid = (B // nb, HW_pad // tn)

    weight_bytes = (Hc_pad * Cin + Cout * Hc_pad) * c_isz + (Hc_pad + Cout) * 4
    cost = pl.CostEstimate(
        flops=2 * B * HW_pad * (Cin * Hc_pad + Hc_pad * Cout),
        transcendentals=0,
        bytes_accessed=B * HW_pad * (Cin + Cout) * x_isz + weight_bytes,
    )

    kernel = functools.partial(_grouped_pointwise_kernel, nb=nb, acc_dtype=acc_dtype)

    out_cm = pl.pallas_call(
        kernel,
        out_shape=jax.ShapeDtypeStruct((B, Cout, HW_pad), x.dtype),
        grid_spec=pltpu.PrefetchScalarGridSpec(
            num_scalar_prefetch=0,
            grid=grid,
            in_specs=[
                pl.BlockSpec((nb, Cin, tn), lambda b, j: (b, 0, j)),     # x tile
                pl.BlockSpec((Hc_pad, Cin), lambda b, j: (0, 0)),        # W1^T (resident)
                pl.BlockSpec((Hc_pad, 1), lambda b, j: (0, 0)),          # b1
                pl.BlockSpec((Cout, Hc_pad), lambda b, j: (0, 0)),       # W2^T (resident)
                pl.BlockSpec((Cout, 1), lambda b, j: (0, 0)),            # b2
            ],
            out_specs=pl.BlockSpec((nb, Cout, tn), lambda b, j: (b, 0, j)),
        ),
        compiler_params=pltpu.CompilerParams(
            dimension_semantics=("parallel", "parallel"),
            vmem_limit_bytes=vmem_limit,
        ),
        cost_estimate=cost,
    )(x_cm, w1t, b1_col, w2t, b2_col)

    if HW_pad != HW:
        out_cm = out_cm[:, :, :HW]
    # Free contiguous reshape back to NCHW.
    return out_cm.reshape(B, Cout, H, W)


# ---------------------------------------------------------------------------
# Plain-JAX reference (for correctness check)
# ---------------------------------------------------------------------------
def _reference(x, w1, b1, w2, b2, groups):
    def gconv(x, w, b):
        B, Cin, H, W = x.shape
        Cout, cin_pg = w.shape[0], w.shape[1]
        cout_pg = Cout // groups
        xg = x.reshape(B, groups, cin_pg, H, W)
        wg = w[:, :, 0, 0].reshape(groups, cout_pg, cin_pg)
        y = jnp.einsum("bgchw,goc->bgohw", xg, wg).reshape(B, Cout, H, W)
        return y + b.reshape(1, Cout, 1, 1)

    h = jnp.maximum(gconv(x, w1, b1), 0.0)
    return gconv(h, w2, b2)


if __name__ == "__main__":
    # Module defaults: in_channels=144, out_channels=12, groups=12, hidden_c=96
    in_channels, out_channels, groups, hidden_c = 144, 12, 12, 96
    B, H, W = 2, 16, 16

    key = jax.random.PRNGKey(0)
    kx, kw1, kb1, kw2, kb2 = jax.random.split(key, 5)

    x = jax.random.normal(kx, (B, in_channels, H, W), dtype=jnp.float32)
    # Conv2d weight shapes: (out_c, in_c // groups, 1, 1); biases: (out_c,)
    w1 = 0.1 * jax.random.normal(kw1, (hidden_c, in_channels // groups, 1, 1), jnp.float32)
    b1 = 0.1 * jax.random.normal(kb1, (hidden_c,), jnp.float32)
    w2 = 0.1 * jax.random.normal(kw2, (out_channels, hidden_c // groups, 1, 1), jnp.float32)
    b2 = 0.1 * jax.random.normal(kb2, (out_channels,), jnp.float32)

    ref = _reference(x, w1, b1, w2, b2, groups)

    # f32 MXU path.
    out_f32 = jax.block_until_ready(
        convolution_op(x, w1, b1, w2, b2, groups=groups, compute_dtype=jnp.float32))
    assert out_f32.shape == (B, out_channels, H, W), out_f32.shape
    assert jnp.allclose(out_f32, ref, atol=2e-3, rtol=2e-3), \
        float(jnp.max(jnp.abs(out_f32 - ref)))

    # Fast bf16 MXU (+ bf16 epilogue on v6e/v7x) path: loose tolerance.
    out_bf16 = jax.block_until_ready(
        convolution_op(x, w1, b1, w2, b2, groups=groups, compute_dtype=jnp.bfloat16))
    assert out_bf16.shape == (B, out_channels, H, W), out_bf16.shape
    assert jnp.allclose(out_bf16, ref, atol=5e-2, rtol=5e-2), \
        float(jnp.max(jnp.abs(out_bf16 - ref)))

    print("KERNEL_OK")
</pallas_src>

<mosaic_0001>
module attributes {stable_mosaic.version = 11 : i64} {
  func.func @_grouped_pointwise_kernel(%arg0: i32, %arg1: i32, %arg2: memref<2x144x256xf32, #tpu.memory_space<vmem>>, %arg3: memref<128x144xf32, #tpu.memory_space<vmem>>, %arg4: memref<128x1xf32, #tpu.memory_space<vmem>>, %arg5: memref<12x128xf32, #tpu.memory_space<vmem>>, %arg6: memref<12x1xf32, #tpu.memory_space<vmem>>, %arg7: memref<2x12x256xf32, #tpu.memory_space<vmem>>) attributes {dimension_semantics = [#tpu.dimension_semantics<parallel>, #tpu.dimension_semantics<parallel>], iteration_bounds = array<i64: 1, 1>, scalar_prefetch = 0 : i64, scratch_operands = 0 : i64, tpu.core_type = #tpu.core_type<tc>, window_params = [{transform_indices = @transform_0, window_bounds = array<i64: 2, 144, 256>}, {pipeline_mode = #tpu.pipeline_mode<synchronous>, transform_indices = @transform_1, window_bounds = array<i64: 128, 144>}, {pipeline_mode = #tpu.pipeline_mode<synchronous>, transform_indices = @transform_2, window_bounds = array<i64: 128, 1>}, {pipeline_mode = #tpu.pipeline_mode<synchronous>, transform_indices = @transform_3, window_bounds = array<i64: 12, 128>}, {pipeline_mode = #tpu.pipeline_mode<synchronous>, transform_indices = @transform_4, window_bounds = array<i64: 12, 1>}, {transform_indices = @transform_5, window_bounds = array<i64: 2, 12, 256>}]} {
    %c0 = arith.constant 0 : index
    %c0_0 = arith.constant 0 : index
    %c0_1 = arith.constant 0 : index
    %0 = vector.load %arg2[%c0, %c0_0, %c0_1] : memref<2x144x256xf32, #tpu.memory_space<vmem>>, vector<1x144x256xf32>
    %1 = vector.shape_cast %0 : vector<1x144x256xf32> to vector<144x256xf32>
    %c0_2 = arith.constant 0 : index
    %c0_3 = arith.constant 0 : index
    %2 = vector.load %arg3[%c0_2, %c0_3] : memref<128x144xf32, #tpu.memory_space<vmem>>, vector<128x144xf32>
    %cst = arith.constant dense<0.000000e+00> : vector<128x256xf32>
    %3 = tpu.matmul %2, %1, %cst {dimension_numbers = #tpu.dot_dimension_numbers<[1], [0], [0], [1], [0, 0, 1, 1], [], []>} : vector<128x144xf32>, vector<144x256xf32>, vector<128x256xf32> -> vector<128x256xf32>
    %c0_4 = arith.constant 0 : index
    %c0_5 = arith.constant 0 : index
    %4 = vector.load %arg4[%c0_4, %c0_5] : memref<128x1xf32, #tpu.memory_space<vmem>>, vector<128x1xf32>
    %5 = vector.broadcast %4 : vector<128x1xf32> to vector<128x256xf32>
    %6 = arith.addf %3, %5 : vector<128x256xf32>
    %cst_6 = arith.constant 0.000000e+00 : f32
    %7 = vector.broadcast %cst_6 : f32 to vector<128x256xf32>
    %8 = arith.maximumf %6, %7 : vector<128x256xf32>
    %c0_7 = arith.constant 0 : index
    %c0_8 = arith.constant 0 : index
    %9 = vector.load %arg5[%c0_7, %c0_8] : memref<12x128xf32, #tpu.memory_space<vmem>>, vector<12x128xf32>
    %cst_9 = arith.constant dense<0.000000e+00> : vector<12x256xf32>
    %10 = tpu.matmul %9, %8, %cst_9 {dimension_numbers = #tpu.dot_dimension_numbers<[1], [0], [0], [1], [0, 0, 1, 1], [], []>} : vector<12x128xf32>, vector<128x256xf32>, vector<12x256xf32> -> vector<12x256xf32>
    %c0_10 = arith.constant 0 : index
    %c0_11 = arith.constant 0 : index
    %11 = vector.load %arg6[%c0_10, %c0_11] : memref<12x1xf32, #tpu.memory_space<vmem>>, vector<12x1xf32>
    %12 = vector.broadcast %11 : vector<12x1xf32> to vector<12x256xf32>
    %13 = arith.addf %10, %12 : vector<12x256xf32>
    %c0_12 = arith.constant 0 : index
    %c0_13 = arith.constant 0 : index
    %c0_14 = arith.constant 0 : index
    %14 = vector.load %arg7[%c0_12, %c0_13, %c0_14] : memref<2x12x256xf32, #tpu.memory_space<vmem>>, vector<1x12x256xf32>
    %15 = vector.shape_cast %14 : vector<1x12x256xf32> to vector<12x256xf32>
    %16 = vector.shape_cast %13 : vector<12x256xf32> to vector<1x12x256xf32>
    tpu.vector_store %arg7[%c0_12, %c0_13, %c0_14], %16 {strides = array<i32>} : memref<2x12x256xf32, #tpu.memory_space<vmem>>, vector<1x12x256xf32>,
    %c1 = arith.constant 1 : index
    %c0_15 = arith.constant 0 : index
    %c0_16 = arith.constant 0 : index
    %17 = vector.load %arg2[%c1, %c0_15, %c0_16] : memref<2x144x256xf32, #tpu.memory_space<vmem>>, vector<1x144x256xf32>
    %18 = vector.shape_cast %17 : vector<1x144x256xf32> to vector<144x256xf32>
    %c0_17 = arith.constant 0 : index
    %c0_18 = arith.constant 0 : index
    %19 = vector.load %arg3[%c0_17, %c0_18] : memref<128x144xf32, #tpu.memory_space<vmem>>, vector<128x144xf32>
    %cst_19 = arith.constant dense<0.000000e+00> : vector<128x256xf32>
    %20 = tpu.matmul %19, %18, %cst_19 {dimension_numbers = #tpu.dot_dimension_numbers<[1], [0], [0], [1], [0, 0, 1, 1], [], []>} : vector<128x144xf32>, vector<144x256xf32>, vector<128x256xf32> -> vector<128x256xf32>
    %c0_20 = arith.constant 0 : index
    %c0_21 = arith.constant 0 : index
    %21 = vector.load %arg4[%c0_20, %c0_21] : memref<128x1xf32, #tpu.memory_space<vmem>>, vector<128x1xf32>
    %22 = vector.broadcast %21 : vector<128x1xf32> to vector<128x256xf32>
    %23 = arith.addf %20, %22 : vector<128x256xf32>
    %cst_22 = arith.constant 0.000000e+00 : f32
    %24 = vector.broadcast %cst_22 : f32 to vector<128x256xf32>
    %25 = arith.maximumf %23, %24 : vector<128x256xf32>
    %c0_23 = arith.constant 0 : index
    %c0_24 = arith.constant 0 : index
    %26 = vector.load %arg5[%c0_23, %c0_24] : memref<12x128xf32, #tpu.memory_space<vmem>>, vector<12x128xf32>
    %cst_25 = arith.constant dense<0.000000e+00> : vector<12x256xf32>
    %27 = tpu.matmul %26, %25, %cst_25 {dimension_numbers = #tpu.dot_dimension_numbers<[1], [0], [0], [1], [0, 0, 1, 1], [], []>} : vector<12x128xf32>, vector<128x256xf32>, vector<12x256xf32> -> vector<12x256xf32>
    %c0_26 = arith.constant 0 : index
    %c0_27 = arith.constant 0 : index
    %28 = vector.load %arg6[%c0_26, %c0_27] : memref<12x1xf32, #tpu.memory_space<vmem>>, vector<12x1xf32>
    %29 = vector.broadcast %28 : vector<12x1xf32> to vector<12x256xf32>
    %30 = arith.addf %27, %29 : vector<12x256xf32>
    %c1_28 = arith.constant 1 : index
    %c0_29 = arith.constant 0 : index
    %c0_30 = arith.constant 0 : index
    %31 = vector.load %arg7[%c1_28, %c0_29, %c0_30] : memref<2x12x256xf32, #tpu.memory_space<vmem>>, vector<1x12x256xf32>
    %32 = vector.shape_cast %31 : vector<1x12x256xf32> to vector<12x256xf32>
    %33 = vector.shape_cast %30 : vector<12x256xf32> to vector<1x12x256xf32>
    tpu.vector_store %arg7[%c1_28, %c0_29, %c0_30], %33 {strides = array<i32>} : memref<2x12x256xf32, #tpu.memory_space<vmem>>, vector<1x12x256xf32>,
    return
  }
  func.func @transform_0(%arg0: i32, %arg1: i32) -> (i32, i32, i32) {
    %c0_i32 = arith.constant 0 : i32
    %c0_i32_0 = arith.constant 0 : i32
    return %arg0, %c0_i32, %arg1 : i32, i32, i32
  }
  func.func @transform_1(%arg0: i32, %arg1: i32) -> (i32, i32) {
    %c0_i32 = arith.constant 0 : i32
    %c0_i32_0 = arith.constant 0 : i32
    %c0_i32_1 = arith.constant 0 : i32
    return %c0_i32, %c0_i32_0 : i32, i32
  }
  func.func @transform_2(%arg0: i32, %arg1: i32) -> (i32, i32) {
    %c0_i32 = arith.constant 0 : i32
    %c0_i32_0 = arith.constant 0 : i32
    %c0_i32_1 = arith.constant 0 : i32
    return %c0_i32, %c0_i32_0 : i32, i32
  }
  func.func @transform_3(%arg0: i32, %arg1: i32) -> (i32, i32) {
    %c0_i32 = arith.constant 0 : i32
    %c0_i32_0 = arith.constant 0 : i32
    %c0_i32_1 = arith.constant 0 : i32
    return %c0_i32, %c0_i32_0 : i32, i32
  }
  func.func @transform_4(%arg0: i32, %arg1: i32) -> (i32, i32) {
    %c0_i32 = arith.constant 0 : i32
    %c0_i32_0 = arith.constant 0 : i32
    %c0_i32_1 = arith.constant 0 : i32
    return %c0_i32, %c0_i32_0 : i32, i32
  }
  func.func @transform_5(%arg0: i32, %arg1: i32) -> (i32, i32, i32) {
    %c0_i32 = arith.constant 0 : i32
    %c0_i32_0 = arith.constant 0 : i32
    return %arg0, %c0_i32, %arg1 : i32, i32, i32
  }
}

</mosaic_0001>

<llo_original>
// kernel: convolution_op.1
$region0: #{convolution_op.1}
  #allocation0 [shape = 'u32[]', space=smem, size = 0x4, offset = 0x4, fixed_abs, tag = 'smem constant byte address 0x4 - core index']
  #allocation1 [shape = 'u32[72,128]{1,0:T(1,128)}', space=vmem, size = 0x9000, scoped, tag = 'internal scratch']
  %s0 = inlined_call_operand.vmem [shape: f32[2,144,256], index: 0, kind: input, shape index: {}]
  %s1 = inlined_call_operand.vmem [shape: f32[128,144], index: 1, kind: input, shape index: {}]
  %s2 = inlined_call_operand.vmem [shape: f32[128,1], index: 2, kind: input, shape index: {}]
  %s3 = inlined_call_operand.vmem [shape: f32[12,128], index: 3, kind: input, shape index: {}]
  %s4 = inlined_call_operand.vmem [shape: f32[12,1], index: 4, kind: input, shape index: {}]
  %s5 = inlined_call_operand.vmem [shape: f32[2,12,256], index: 5, kind: output, shape index: {}]
  %s6 = sld [smem:[#allocation0]]
  $region30: #{convolution_op.1} parent=0
    _
  %s8 = ssub.s32 1, %s6
  %s9 = scalar_select 0, %s8, %s6
  // Predicated region
  $region2: #{convolution_op.1} parent=0 // pred_check
    _
  $region3: #{convolution_op.1} parent=0 // pred_check_branch
    %11 = sbr.rel (0) target = $region5
  $region4: #{convolution_op.1} parent=0 // pred_region
    _
  $region5: #{convolution_op.1} parent=0 // pred_fallthru
    _
  // Predicated region
  $region6: #{convolution_op.1} parent=0 // pred_check
    _
  $region7: #{convolution_op.1} parent=0 // pred_check_branch
    %13 = sbr.rel (0) target = $region9
  $region8: #{convolution_op.1} parent=0 // pred_region
    _
  $region9: #{convolution_op.1} parent=0 // pred_fallthru
    _
  // Predicated region
  $region10: #{convolution_op.1} parent=0 // pred_check
    _
  $region11: #{convolution_op.1} parent=0 // pred_check_branch
    %15 = sbr.rel (0) target = $region13
  $region12: #{convolution_op.1} parent=0 // pred_region
    _
  $region13: #{convolution_op.1} parent=0 // pred_fallthru
    _
  // Predicated region
  $region14: #{convolution_op.1} parent=0 // pred_check
    _
  $region15: #{convolution_op.1} parent=0 // pred_check_branch
    %17 = sbr.rel (0) target = $region17
  $region16: #{convolution_op.1} parent=0 // pred_region
    _
  $region17: #{convolution_op.1} parent=0 // pred_fallthru
    _
  // Predicated region
  $region18: #{convolution_op.1} parent=0 // pred_check
    _
  $region19: #{convolution_op.1} parent=0 // pred_check_branch
    %19 = sbr.rel (0) target = $region21
  $region20: #{convolution_op.1} parent=0 // pred_region
    _
  $region21: #{convolution_op.1} parent=0 // pred_fallthru
    _
  %v20 = vld [vmem:[%s0] sm:$0xff]
  %v21 = vld [vmem:[%s0 + $0x8] sm:$0xff]
  %v22 = vld [vmem:[%s0 + $0x10] sm:$0xff]
  %v23 = vld [vmem:[%s0 + $0x18] sm:$0xff]
  %v24 = vld [vmem:[%s0 + $0x20] sm:$0xff]
  %v25 = vld [vmem:[%s0 + $0x28] sm:$0xff]
  %v26 = vld [vmem:[%s0 + $0x30] sm:$0xff]
  %v27 = vld [vmem:[%s0 + $0x38] sm:$0xff]
  %v28 = vld [vmem:[%s0 + $0x40] sm:$0xff]
  %v29 = vld [vmem:[%s0 + $0x48] sm:$0xff]
  %v30 = vld [vmem:[%s0 + $0x50] sm:$0xff]
  %v31 = vld [vmem:[%s0 + $0x58] sm:$0xff]
  %v32 = vld [vmem:[%s0 + $0x60] sm:$0xff]
  %v33 = vld [vmem:[%s0 + $0x68] sm:$0xff]
  %v34 = vld [vmem:[%s0 + $0x70] sm:$0xff]
  %v35 = vld [vmem:[%s0 + $0x78] sm:$0xff]
  %v36 = vld [vmem:[%s0 + $0x80] sm:$0xff]
  %v37 = vld [vmem:[%s0 + $0x88] sm:$0xff]
  %v38 = vld [vmem:[%s0 + $0x90] sm:$0xff]
  %v39 = vld [vmem:[%s0 + $0x98] sm:$0xff]
  %v40 = vld [vmem:[%s0 + $0xa0] sm:$0xff]
  %v41 = vld [vmem:[%s0 + $0xa8] sm:$0xff]
  %v42 = vld [vmem:[%s0 + $0xb0] sm:$0xff]
  %v43 = vld [vmem:[%s0 + $0xb8] sm:$0xff]
  %v44 = vld [vmem:[%s0 + $0xc0] sm:$0xff]
  %v45 = vld [vmem:[%s0 + $0xc8] sm:$0xff]
  %v46 = vld [vmem:[%s0 + $0xd0] sm:$0xff]
  %v47 = vld [vmem:[%s0 + $0xd8] sm:$0xff]
  %v48 = vld [vmem:[%s0 + $0xe0] sm:$0xff]
  %v49 = vld [vmem:[%s0 + $0xe8] sm:$0xff]
  %v50 = vld [vmem:[%s0 + $0xf0] sm:$0xff]
  %v51 = vld [vmem:[%s0 + $0xf8] sm:$0xff]
  %v52 = vld [vmem:[%s0 + $0x100] sm:$0xff]
  %v53 = vld [vmem:[%s0 + $0x108] sm:$0xff]
  %v54 = vld [vmem:[%s0 + $0x110] sm:$0xff]
  %v55 = vld [vmem:[%s0 + $0x118] sm:$0xff]
  %v56 = vld [vmem:[%s1] sm:$0xff]
  %v57 = vld [vmem:[%s1 + $0x8] sm:$0xff]
  %v58 = vld [vmem:[%s1 + $0x10] sm:$0xff]
  %v59 = vld [vmem:[%s1 + $0x18] sm:$0xff]
  %v60 = vld [vmem:[%s1 + $0x20] sm:$0xff]
  %v61 = vld [vmem:[%s1 + $0x28] sm:$0xff]
  %v62 = vld [vmem:[%s1 + $0x30] sm:$0xff]
  %v63 = vld [vmem:[%s1 + $0x38] sm:$0xff]
  %v64 = vld [vmem:[%s1 + $0x40] sm:$0xff]
  %v65 = vld [vmem:[%s1 + $0x48] sm:$0xff]
  %v66 = vld [vmem:[%s1 + $0x50] sm:$0xff]
  %v67 = vld [vmem:[%s1 + $0x58] sm:$0xff]
  %v68 = vld [vmem:[%s1 + $0x60] sm:$0xff]
  %v69 = vld [vmem:[%s1 + $0x68] sm:$0xff]
  %v70 = vld [vmem:[%s1 + $0x70] sm:$0xff]
  %v71 = vld [vmem:[%s1 + $0x78] sm:$0xff]
  %v72 = vld [vmem:[%s1 + $0x80] sm:$0xff]
  %v73 = vld [vmem:[%s1 + $0x88] sm:$0xff]
  %v74 = vld [vmem:[%s1 + $0x90] sm:$0xff]
  %v75 = vld [vmem:[%s1 + $0x98] sm:$0xff]
  %v76 = vld [vmem:[%s1 + $0xa0] sm:$0xff]
  %v77 = vld [vmem:[%s1 + $0xa8] sm:$0xff]
  %v78 = vld [vmem:[%s1 + $0xb0] sm:$0xff]
  %v79 = vld [vmem:[%s1 + $0xb8] sm:$0xff]
  %v80 = vld [vmem:[%s1 + $0xc0] sm:$0xff]
  %v81 = vld [vmem:[%s1 + $0xc8] sm:$0xff]
  %v82 = vld [vmem:[%s1 + $0xd0] sm:$0xff]
  %v83 = vld [vmem:[%s1 + $0xd8] sm:$0xff]
  %v84 = vld [vmem:[%s1 + $0xe0] sm:$0xff]
  %v85 = vld [vmem:[%s1 + $0xe8] sm:$0xff]
  %v86 = vld [vmem:[%s1 + $0xf0] sm:$0xff]
  %v87 = vld [vmem:[%s1 + $0xf8] sm:$0xff]
  %v88 = vld [vmem:[%s2] sm:$0xff]
  %v89 = vld [vmem:[%s2 + $0x8] sm:$0xff]
  %v90 = vld [vmem:[%s2 + $0x10] sm:$0xff]
  %v91 = vld [vmem:[%s2 + $0x18] sm:$0xff]
  %v92 = vld [vmem:[%s2 + $0x20] sm:$0xff]
  %v93 = vld [vmem:[%s2 + $0x28] sm:$0xff]
  %v94 = vld [vmem:[%s2 + $0x30] sm:$0xff]
  %v95 = vld [vmem:[%s2 + $0x38] sm:$0xff]
  %v96 = vld [vmem:[%s2 + $0x40] sm:$0xff]
  %v97 = vld [vmem:[%s2 + $0x48] sm:$0xff]
  %v98 = vld [vmem:[%s2 + $0x50] sm:$0xff]
  %v99 = vld [vmem:[%s2 + $0x58] sm:$0xff]
  %v100 = vld [vmem:[%s2 + $0x60] sm:$0xff]
  %v101 = vld [vmem:[%s2 + $0x68] sm:$0xff]
  %v102 = vld [vmem:[%s2 + $0x70] sm:$0xff]
  %v103 = vld [vmem:[%s2 + $0x78] sm:$0xff]
  %105 = vset.pattern.permute.xlu0 0
  %106 = vperm.xlu0 %105, %v88
  %v107 = vpop.permute.xlu0 %106
  %110 = vset.pattern.permute.xlu0 0
  %111 = vperm.xlu0 %110, %v89
  %v112 = vpop.permute.xlu0 %111
  %115 = vset.pattern.permute.xlu0 0
  %116 = vperm.xlu0 %115, %v90
  %v117 = vpop.permute.xlu0 %116
  %120 = vset.pattern.permute.xlu0 0
  %121 = vperm.xlu0 %120, %v91
  %v122 = vpop.permute.xlu0 %121
  %125 = vset.pattern.permute.xlu0 0
  %126 = vperm.xlu0 %125, %v92
  %v127 = vpop.permute.xlu0 %126
  %130 = vset.pattern.permute.xlu0 0
  %131 = vperm.xlu0 %130, %v93
  %v132 = vpop.permute.xlu0 %131
  %135 = vset.pattern.permute.xlu0 0
  %136 = vperm.xlu0 %135, %v94
  %v137 = vpop.permute.xlu0 %136
  %140 = vset.pattern.permute.xlu0 0
  %141 = vperm.xlu0 %140, %v95
  %v142 = vpop.permute.xlu0 %141
  %145 = vset.pattern.permute.xlu0 0
  %146 = vperm.xlu0 %145, %v96
  %v147 = vpop.permute.xlu0 %146
  %150 = vset.pattern.permute.xlu0 0
  %151 = vperm.xlu0 %150, %v97
  %v152 = vpop.permute.xlu0 %151
  %155 = vset.pattern.permute.xlu0 0
  %156 = vperm.xlu0 %155, %v98
  %v157 = vpop.permute.xlu0 %156
  %160 = vset.pattern.permute.xlu0 0
  %161 = vperm.xlu0 %160, %v99
  %v162 = vpop.permute.xlu0 %161
  %165 = vset.pattern.permute.xlu0 0
  %166 = vperm.xlu0 %165, %v100
  %v167 = vpop.permute.xlu0 %166
  %170 = vset.pattern.permute.xlu0 0
  %171 = vperm.xlu0 %170, %v101
  %v172 = vpop.permute.xlu0 %171
  %175 = vset.pattern.permute.xlu0 0
  %176 = vperm.xlu0 %175, %v102
  %v177 = vpop.permute.xlu0 %176
  %180 = vset.pattern.permute.xlu0 0
  %181 = vperm.xlu0 %180, %v103
  %v182 = vpop.permute.xlu0 %181
  %vm184 = vcmask 130048
  %v186 = vsel %vm184, %v57, 0
  %v189 = vsel %vm184, %v59, 0
  %v192 = vsel %vm184, %v61, 0
  %v195 = vsel %vm184, %v63, 0
  %v198 = vsel %vm184, %v65, 0
  %v201 = vsel %vm184, %v67, 0
  %v204 = vsel %vm184, %v69, 0
  %v207 = vsel %vm184, %v71, 0
  %v210 = vsel %vm184, %v73, 0
  %v213 = vsel %vm184, %v75, 0
  %v216 = vsel %vm184, %v77, 0
  %v219 = vsel %vm184, %v79, 0
  %v222 = vsel %vm184, %v81, 0
  %v225 = vsel %vm184, %v83, 0
  %v228 = vsel %vm184, %v85, 0
  %v231 = vsel %vm184, %v87, 0
  %233 = vmatpush.msra.mxu0 %v50
  %234 = vmatpush.msra.mxu0 %v48
  %235 = vmatpush.msra.mxu0 %v46
  %236 = vmatpush.msra.mxu0 %v44
  %237 = vmatpush.msra.mxu0 %v42
  %238 = vmatpush.msra.mxu0 %v40
  %239 = vmatpush.msra.mxu0 %v38
  %240 = vmatpush.msra.mxu0 %v36
  %241 = vmatpush.msra.mxu0 %v34
  %242 = vmatpush.msra.mxu0 %v32
  %243 = vmatpush.msra.mxu0 %v30
  %244 = vmatpush.msra.mxu0 %v28
  %245 = vmatpush.msra.mxu0 %v26
  %246 = vmatpush.msra.mxu0 %v24
  %247 = vmatpush.msra.mxu0 %v22
  %248 = vmatpush.msra.mxu0 %v20
  %249 = vmatmul.f32.gmra.mxu0 %v56
  %v250 = vpop.f32.mrf.mxu0
  %v251 = vadd.f32 %v107, %v250
  %252 = vmatmul.f32.gmra.mxu0 %v58
  %v253 = vpop.f32.mrf.mxu0
  %v254 = vadd.f32 %v112, %v253
  %255 = vmatmul.f32.gmra.mxu0 %v60
  %v256 = vpop.f32.mrf.mxu0
  %v257 = vadd.f32 %v117, %v256
  %258 = vmatmul.f32.gmra.mxu0 %v62
  %v259 = vpop.f32.mrf.mxu0
  %v260 = vadd.f32 %v122, %v259
  %261 = vmatmul.f32.gmra.mxu0 %v64
  %v262 = vpop.f32.mrf.mxu0
  %v263 = vadd.f32 %v127, %v262
  %264 = vmatmul.f32.gmra.mxu0 %v66
  %v265 = vpop.f32.mrf.mxu0
  %v266 = vadd.f32 %v132, %v265
  %267 = vmatmul.f32.gmra.mxu0 %v68
  %v268 = vpop.f32.mrf.mxu0
  %v269 = vadd.f32 %v137, %v268
  %270 = vmatmul.f32.gmra.mxu0 %v70
  %v271 = vpop.f32.mrf.mxu0
  %v272 = vadd.f32 %v142, %v271
  %273 = vmatmul.f32.gmra.mxu0 %v72
  %v274 = vpop.f32.mrf.mxu0
  %v275 = vadd.f32 %v147, %v274
  %276 = vmatmul.f32.gmra.mxu0 %v74
  %v277 = vpop.f32.mrf.mxu0
  %v278 = vadd.f32 %v152, %v277
  %279 = vmatmul.f32.gmra.mxu0 %v76
  %v280 = vpop.f32.mrf.mxu0
  %v281 = vadd.f32 %v157, %v280
  %282 = vmatmul.f32.gmra.mxu0 %v78
  %v283 = vpop.f32.mrf.mxu0
  %v284 = vadd.f32 %v162, %v283
  %285 = vmatmul.f32.gmra.mxu0 %v80
  %v286 = vpop.f32.mrf.mxu0
  %v287 = vadd.f32 %v167, %v286
  %288 = vmatmul.f32.gmra.mxu0 %v82
  %v289 = vpop.f32.mrf.mxu0
  %v290 = vadd.f32 %v172, %v289
  %291 = vmatmul.f32.gmra.mxu0 %v84
  %v292 = vpop.f32.mrf.mxu0
  %v293 = vadd.f32 %v177, %v292
  %294 = vmatmul.f32.gmra.mxu0 %v86
  %v295 = vpop.f32.mrf.mxu0
  %v296 = vadd.f32 %v182, %v295
  %297 = vdwg.mxu0
  %298 = vmatpush.msra.mxu0 0.0
  %299 = vmatpush.msra.mxu0 0.0
  %300 = vmatpush.msra.mxu0 0.0
  %301 = vmatpush.msra.mxu0 0.0
  %302 = vmatpush.msra.mxu0 0.0
  %303 = vmatpush.msra.mxu0 0.0
  %304 = vmatpush.msra.mxu0 0.0
  %305 = vmatpush.msra.mxu0 0.0
  %306 = vmatpush.msra.mxu0 0.0
  %307 = vmatpush.msra.mxu0 0.0
  %308 = vmatpush.msra.mxu0 0.0
  %309 = vmatpush.msra.mxu0 0.0
  %310 = vmatpush.msra.mxu0 0.0
  %311 = vmatpush.msra.mxu0 0.0
  %312 = vmatpush.msra.mxu0 %v54
  %313 = vmatpush.msra.mxu0 %v52
  %314 = vmatmul.f32.gmra.mxu0 %v186
  %v315 = vpop.f32.mrf.mxu0
  %v316 = vadd.f32 %v251, %v315
  %317 = vmatmul.f32.gmra.mxu0 %v189
  %v318 = vpop.f32.mrf.mxu0
  %v319 = vadd.f32 %v254, %v318
  %320 = vmatmul.f32.gmra.mxu0 %v192
  %v321 = vpop.f32.mrf.mxu0
  %v322 = vadd.f32 %v257, %v321
  %323 = vmatmul.f32.gmra.mxu0 %v195
  %v324 = vpop.f32.mrf.mxu0
  %v325 = vadd.f32 %v260, %v324
  %326 = vmatmul.f32.gmra.mxu0 %v198
  %v327 = vpop.f32.mrf.mxu0
  %v328 = vadd.f32 %v263, %v327
  %329 = vmatmul.f32.gmra.mxu0 %v201
  %v330 = vpop.f32.mrf.mxu0
  %v331 = vadd.f32 %v266, %v330
  %332 = vmatmul.f32.gmra.mxu0 %v204
  %v333 = vpop.f32.mrf.mxu0
  %v334 = vadd.f32 %v269, %v333
  %335 = vmatmul.f32.gmra.mxu0 %v207
  %v336 = vpop.f32.mrf.mxu0
  %v337 = vadd.f32 %v272, %v336
  %338 = vmatmul.f32.gmra.mxu0 %v210
  %v339 = vpop.f32.mrf.mxu0
  %v340 = vadd.f32 %v275, %v339
  %341 = vmatmul.f32.gmra.mxu0 %v213
  %v342 = vpop.f32.mrf.mxu0
  %v343 = vadd.f32 %v278, %v342
  %344 = vmatmul.f32.gmra.mxu0 %v216
  %v345 = vpop.f32.mrf.mxu0
  %v346 = vadd.f32 %v281, %v345
  %347 = vmatmul.f32.gmra.mxu0 %v219
  %v348 = vpop.f32.mrf.mxu0
  %v349 = vadd.f32 %v284, %v348
  %350 = vmatmul.f32.gmra.mxu0 %v222
  %v351 = vpop.f32.mrf.mxu0
  %v352 = vadd.f32 %v287, %v351
  %353 = vmatmul.f32.gmra.mxu0 %v225
  %v354 = vpop.f32.mrf.mxu0
  %v355 = vadd.f32 %v290, %v354
  %356 = vmatmul.f32.gmra.mxu0 %v228
  %v357 = vpop.f32.mrf.mxu0
  %v358 = vadd.f32 %v293, %v357
  %359 = vmatmul.f32.gmra.mxu0 %v231
  %v360 = vpop.f32.mrf.mxu0
  %v361 = vadd.f32 %v296, %v360
  %362 = vdwg.mxu0
  %363 = vmatpush.msra.mxu0 %v51
  %364 = vmatpush.msra.mxu0 %v49
  %365 = vmatpush.msra.mxu0 %v47
  %366 = vmatpush.msra.mxu0 %v45
  %367 = vmatpush.msra.mxu0 %v43
  %368 = vmatpush.msra.mxu0 %v41
  %369 = vmatpush.msra.mxu0 %v39
  %370 = vmatpush.msra.mxu0 %v37
  %371 = vmatpush.msra.mxu0 %v35
  %372 = vmatpush.msra.mxu0 %v33
  %373 = vmatpush.msra.mxu0 %v31
  %374 = vmatpush.msra.mxu0 %v29
  %375 = vmatpush.msra.mxu0 %v27
  %376 = vmatpush.msra.mxu0 %v25
  %377 = vmatpush.msra.mxu0 %v23
  %378 = vmatpush.msra.mxu0 %v21
  %379 = vmatmul.f32.gmra.mxu0 %v56
  %v380 = vpop.f32.mrf.mxu0
  %v381 = vadd.f32 %v107, %v380
  %382 = vmatmul.f32.gmra.mxu0 %v58
  %v383 = vpop.f32.mrf.mxu0
  %v384 = vadd.f32 %v112, %v383
  %385 = vmatmul.f32.gmra.mxu0 %v60
  %v386 = vpop.f32.mrf.mxu0
  %v387 = vadd.f32 %v117, %v386
  %388 = vmatmul.f32.gmra.mxu0 %v62
  %v389 = vpop.f32.mrf.mxu0
  %v390 = vadd.f32 %v122, %v389
  %391 = vmatmul.f32.gmra.mxu0 %v64
  %v392 = vpop.f32.mrf.mxu0
  %v393 = vadd.f32 %v127, %v392
  %394 = vmatmul.f32.gmra.mxu0 %v66
  %v395 = vpop.f32.mrf.mxu0
  %v396 = vadd.f32 %v132, %v395
  %397 = vmatmul.f32.gmra.mxu0 %v68
  %v398 = vpop.f32.mrf.mxu0
  %v399 = vadd.f32 %v137, %v398
  %400 = vmatmul.f32.gmra.mxu0 %v70
  %v401 = vpop.f32.mrf.mxu0
  %v402 = vadd.f32 %v142, %v401
  %403 = vmatmul.f32.gmra.mxu0 %v72
  %v404 = vpop.f32.mrf.mxu0
  %v405 = vadd.f32 %v147, %v404
  %406 = vmatmul.f32.gmra.mxu0 %v74
  %v407 = vpop.f32.mrf.mxu0
  %v408 = vadd.f32 %v152, %v407
  %409 = vmatmul.f32.gmra.mxu0 %v76
  %v410 = vpop.f32.mrf.mxu0
  %v411 = vadd.f32 %v157, %v410
  %412 = vmatmul.f32.gmra.mxu0 %v78
  %v413 = vpop.f32.mrf.mxu0
  %v414 = vadd.f32 %v162, %v413
  %415 = vmatmul.f32.gmra.mxu0 %v80
  %v416 = vpop.f32.mrf.mxu0
  %v417 = vadd.f32 %v167, %v416
  %418 = vmatmul.f32.gmra.mxu0 %v82
  %v419 = vpop.f32.mrf.mxu0
  %v420 = vadd.f32 %v172, %v419
  %421 = vmatmul.f32.gmra.mxu0 %v84
  %v422 = vpop.f32.mrf.mxu0
  %v423 = vadd.f32 %v177, %v422
  %424 = vmatmul.f32.gmra.mxu0 %v86
  %v425 = vpop.f32.mrf.mxu0
  %v426 = vadd.f32 %v182, %v425
  %427 = vdwg.mxu0
  %428 = vmatpush.msra.mxu0 0.0
  %429 = vmatpush.msra.mxu0 0.0
  %430 = vmatpush.msra.mxu0 0.0
  %431 = vmatpush.msra.mxu0 0.0
  %432 = vmatpush.msra.mxu0 0.0
  %433 = vmatpush.msra.mxu0 0.0
  %434 = vmatpush.msra.mxu0 0.0
  %435 = vmatpush.msra.mxu0 0.0
  %436 = vmatpush.msra.mxu0 0.0
  %437 = vmatpush.msra.mxu0 0.0
  %438 = vmatpush.msra.mxu0 0.0
  %439 = vmatpush.msra.mxu0 0.0
  %440 = vmatpush.msra.mxu0 0.0
  %441 = vmatpush.msra.mxu0 0.0
  %442 = vmatpush.msra.mxu0 %v55
  %443 = vmatpush.msra.mxu0 %v53
  %444 = vmatmul.f32.gmra.mxu0 %v186
  %v445 = vpop.f32.mrf.mxu0
  %v446 = vadd.f32 %v381, %v445
  %447 = vmatmul.f32.gmra.mxu0 %v189
  %v448 = vpop.f32.mrf.mxu0
  %v449 = vadd.f32 %v384, %v448
  %450 = vmatmul.f32.gmra.mxu0 %v192
  %v451 = vpop.f32.mrf.mxu0
  %v452 = vadd.f32 %v387, %v451
  %453 = vmatmul.f32.gmra.mxu0 %v195
  %v454 = vpop.f32.mrf.mxu0
  %v455 = vadd.f32 %v390, %v454
  %456 = vmatmul.f32.gmra.mxu0 %v198
  %v457 = vpop.f32.mrf.mxu0
  %v458 = vadd.f32 %v393, %v457
  %459 = vmatmul.f32.gmra.mxu0 %v201
  %v460 = vpop.f32.mrf.mxu0
  %v461 = vadd.f32 %v396, %v460
  %462 = vmatmul.f32.gmra.mxu0 %v204
  %v463 = vpop.f32.mrf.mxu0
  %v464 = vadd.f32 %v399, %v463
  %465 = vmatmul.f32.gmra.mxu0 %v207
  %v466 = vpop.f32.mrf.mxu0
  %v467 = vadd.f32 %v402, %v466
  %468 = vmatmul.f32.gmra.mxu0 %v210
  %v469 = vpop.f32.mrf.mxu0
  %v470 = vadd.f32 %v405, %v469
  %471 = vmatmul.f32.gmra.mxu0 %v213
  %v472 = vpop.f32.mrf.mxu0
  %v473 = vadd.f32 %v408, %v472
  %474 = vmatmul.f32.gmra.mxu0 %v216
  %v475 = vpop.f32.mrf.mxu0
  %v476 = vadd.f32 %v411, %v475
  %477 = vmatmul.f32.gmra.mxu0 %v219
  %v478 = vpop.f32.mrf.mxu0
  %v479 = vadd.f32 %v414, %v478
  %480 = vmatmul.f32.gmra.mxu0 %v222
  %v481 = vpop.f32.mrf.mxu0
  %v482 = vadd.f32 %v417, %v481
  %483 = vmatmul.f32.gmra.mxu0 %v225
  %v484 = vpop.f32.mrf.mxu0
  %v485 = vadd.f32 %v420, %v484
  %486 = vmatmul.f32.gmra.mxu0 %v228
  %v487 = vpop.f32.mrf.mxu0
  %v488 = vadd.f32 %v423, %v487
  %489 = vmatmul.f32.gmra.mxu0 %v231
  %v490 = vpop.f32.mrf.mxu0
  %v491 = vadd.f32 %v426, %v490
  %492 = vdwg.mxu0
  %v493 = vmax.f32 %v316, 0.0
  %v494 = vmax.f32 %v446, 0.0
  %v495 = vmax.f32 %v319, 0.0
  %v496 = vmax.f32 %v449, 0.0
  %v497 = vmax.f32 %v322, 0.0
  %v498 = vmax.f32 %v452, 0.0
  %v499 = vmax.f32 %v325, 0.0
  %v500 = vmax.f32 %v455, 0.0
  %v501 = vmax.f32 %v328, 0.0
  %v502 = vmax.f32 %v458, 0.0
  %v503 = vmax.f32 %v331, 0.0
  %v504 = vmax.f32 %v461, 0.0
  %v505 = vmax.f32 %v334, 0.0
  %v506 = vmax.f32 %v464, 0.0
  %v507 = vmax.f32 %v337, 0.0
  %v508 = vmax.f32 %v467, 0.0
  %v509 = vmax.f32 %v340, 0.0
  %v510 = vmax.f32 %v470, 0.0
  %v511 = vmax.f32 %v343, 0.0
  %v512 = vmax.f32 %v473, 0.0
  %v513 = vmax.f32 %v346, 0.0
  %v514 = vmax.f32 %v476, 0.0
  %v515 = vmax.f32 %v349, 0.0
  %v516 = vmax.f32 %v479, 0.0
  %v517 = vmax.f32 %v352, 0.0
  %v518 = vmax.f32 %v482, 0.0
  %v519 = vmax.f32 %v355, 0.0
  %v520 = vmax.f32 %v485, 0.0
  %v521 = vmax.f32 %v358, 0.0
  %v522 = vmax.f32 %v488, 0.0
  %v523 = vmax.f32 %v361, 0.0
  %v524 = vmax.f32 %v491, 0.0
  %v525 = vld [vmem:[%s3] sm:$0xff]
  %v526 = vld [vmem:[%s3 + $0x8] sm:$0xf]
  %v527 = vld [vmem:[%s4] sm:$0xff]
  %v528 = vld [vmem:[%s4 + $0x8] sm:$0xf]
  %530 = vset.pattern.permute.xlu0 0
  %531 = vperm.xlu0 %530, %v527
  %v532 = vpop.permute.xlu0 %531
  %535 = vset.pattern.permute.xlu0 0
  %536 = vperm.xlu0 %535, %v528
  %v537 = vpop.permute.xlu0 %536
  %539 = vmatpush.msra.mxu0 %v523
  %540 = vmatpush.msra.mxu0 %v521
  %541 = vmatpush.msra.mxu0 %v519
  %542 = vmatpush.msra.mxu0 %v517
  %543 = vmatpush.msra.mxu0 %v515
  %544 = vmatpush.msra.mxu0 %v513
  %545 = vmatpush.msra.mxu0 %v511
  %546 = vmatpush.msra.mxu0 %v509
  %547 = vmatpush.msra.mxu0 %v507
  %548 = vmatpush.msra.mxu0 %v505
  %549 = vmatpush.msra.mxu0 %v503
  %550 = vmatpush.msra.mxu0 %v501
  %551 = vmatpush.msra.mxu0 %v499
  %552 = vmatpush.msra.mxu0 %v497
  %553 = vmatpush.msra.mxu0 %v495
  %554 = vmatpush.msra.mxu0 %v493
  %555 = vmatmul.f32.gmra.mxu0 %v525
  %v556 = vpop.f32.mrf.mxu0
  %v557 = vadd.f32 %v532, %v556
  %558 = vmatmul.f32.gmra.mxu0 %v526
  %v559 = vpop.f32.mrf.mxu0
  %v560 = vadd.f32 %v537, %v559
  %561 = vdwg.mxu0
  %562 = vmatpush.msra.mxu0 %v524
  %563 = vmatpush.msra.mxu0 %v522
  %564 = vmatpush.msra.mxu0 %v520
  %565 = vmatpush.msra.mxu0 %v518
  %566 = vmatpush.msra.mxu0 %v516
  %567 = vmatpush.msra.mxu0 %v514
  %568 = vmatpush.msra.mxu0 %v512
  %569 = vmatpush.msra.mxu0 %v510
  %570 = vmatpush.msra.mxu0 %v508
  %571 = vmatpush.msra.mxu0 %v506
  %572 = vmatpush.msra.mxu0 %v504
  %573 = vmatpush.msra.mxu0 %v502
  %574 = vmatpush.msra.mxu0 %v500
  %575 = vmatpush.msra.mxu0 %v498
  %576 = vmatpush.msra.mxu0 %v496
  %577 = vmatpush.msra.mxu0 %v494
  %578 = vmatmul.f32.gmra.mxu0 %v525
  %v579 = vpop.f32.mrf.mxu0
  %v580 = vadd.f32 %v532, %v579
  %581 = vmatmul.f32.gmra.mxu0 %v526
  %v582 = vpop.f32.mrf.mxu0
  %v583 = vadd.f32 %v537, %v582
  %584 = vdwg.mxu0
  %585 = vst [vmem:[%s5] sm:$0xff] %v557
  %586 = vst [vmem:[%s5 + $0x8] sm:$0xff] %v580
  %587 = vst [vmem:[%s5 + $0x10] sm:$0xf] %v560
  %588 = vst [vmem:[%s5 + $0x18] sm:$0xf] %v583
  %s589 = scalar_lea.vmem %s0, 288
  %v590 = vld [vmem:[%s589] sm:$0xff]
  %v591 = vld [vmem:[%s589 + $0x8] sm:$0xff]
  %v592 = vld [vmem:[%s589 + $0x10] sm:$0xff]
  %v593 = vld [vmem:[%s589 + $0x18] sm:$0xff]
  %v594 = vld [vmem:[%s589 + $0x20] sm:$0xff]
  %v595 = vld [vmem:[%s589 + $0x28] sm:$0xff]
  %v596 = vld [vmem:[%s589 + $0x30] sm:$0xff]
  %v597 = vld [vmem:[%s589 + $0x38] sm:$0xff]
  %v598 = vld [vmem:[%s589 + $0x40] sm:$0xff]
  %v599 = vld [vmem:[%s589 + $0x48] sm:$0xff]
  %v600 = vld [vmem:[%s589 + $0x50] sm:$0xff]
  %v601 = vld [vmem:[%s589 + $0x58] sm:$0xff]
  %v602 = vld [vmem:[%s589 + $0x60] sm:$0xff]
  %v603 = vld [vmem:[%s589 + $0x68] sm:$0xff]
  %v604 = vld [vmem:[%s589 + $0x70] sm:$0xff]
  %v605 = vld [vmem:[%s589 + $0x78] sm:$0xff]
  %v606 = vld [vmem:[%s589 + $0x80] sm:$0xff]
  %v607 = vld [vmem:[%s589 + $0x88] sm:$0xff]
  %v608 = vld [vmem:[%s589 + $0x90] sm:$0xff]
  %v609 = vld [vmem:[%s589 + $0x98] sm:$0xff]
  %v610 = vld [vmem:[%s589 + $0xa0] sm:$0xff]
  %v611 = vld [vmem:[%s589 + $0xa8] sm:$0xff]
  %v612 = vld [vmem:[%s589 + $0xb0] sm:$0xff]
  %v613 = vld [vmem:[%s589 + $0xb8] sm:$0xff]
  %v614 = vld [vmem:[%s589 + $0xc0] sm:$0xff]
  %v615 = vld [vmem:[%s589 + $0xc8] sm:$0xff]
  %v616 = vld [vmem:[%s589 + $0xd0] sm:$0xff]
  %v617 = vld [vmem:[%s589 + $0xd8] sm:$0xff]
  %v618 = vld [vmem:[%s589 + $0xe0] sm:$0xff]
  %v619 = vld [vmem:[%s589 + $0xe8] sm:$0xff]
  %v620 = vld [vmem:[%s589 + $0xf0] sm:$0xff]
  %v621 = vld [vmem:[%s589 + $0xf8] sm:$0xff]
  %v622 = vld [vmem:[%s589 + $0x100] sm:$0xff]
  %v623 = vld [vmem:[%s589 + $0x108] sm:$0xff]
  %v624 = vld [vmem:[%s589 + $0x110] sm:$0xff]
  %v625 = vld [vmem:[%s589 + $0x118] sm:$0xff]
  %v626 = vld [vmem:[%s1] sm:$0xff]
  %v627 = vld [vmem:[%s1 + $0x8] sm:$0xff]
  %v628 = vld [vmem:[%s1 + $0x10] sm:$0xff]
  %v629 = vld [vmem:[%s1 + $0x18] sm:$0xff]
  %v630 = vld [vmem:[%s1 + $0x20] sm:$0xff]
  %v631 = vld [vmem:[%s1 + $0x28] sm:$0xff]
  %v632 = vld [vmem:[%s1 + $0x30] sm:$0xff]
  %v633 = vld [vmem:[%s1 + $0x38] sm:$0xff]
  %v634 = vld [vmem:[%s1 + $0x40] sm:$0xff]
  %v635 = vld [vmem:[%s1 + $0x48] sm:$0xff]
  %v636 = vld [vmem:[%s1 + $0x50] sm:$0xff]
  %v637 = vld [vmem:[%s1 + $0x58] sm:$0xff]
  %v638 = vld [vmem:[%s1 + $0x60] sm:$0xff]
  %v639 = vld [vmem:[%s1 + $0x68] sm:$0xff]
  %v640 = vld [vmem:[%s1 + $0x70] sm:$0xff]
  %v641 = vld [vmem:[%s1 + $0x78] sm:$0xff]
  %v642 = vld [vmem:[%s1 + $0x80] sm:$0xff]
  %v643 = vld [vmem:[%s1 + $0x88] sm:$0xff]
  %v644 = vld [vmem:[%s1 + $0x90] sm:$0xff]
  %v645 = vld [vmem:[%s1 + $0x98] sm:$0xff]
  %v646 = vld [vmem:[%s1 + $0xa0] sm:$0xff]
  %v647 = vld [vmem:[%s1 + $0xa8] sm:$0xff]
  %v648 = vld [vmem:[%s1 + $0xb0] sm:$0xff]
  %v649 = vld [vmem:[%s1 + $0xb8] sm:$0xff]
  %v650 = vld [vmem:[%s1 + $0xc0] sm:$0xff]
  %v651 = vld [vmem:[%s1 + $0xc8] sm:$0xff]
  %v652 = vld [vmem:[%s1 + $0xd0] sm:$0xff]
  %v653 = vld [vmem:[%s1 + $0xd8] sm:$0xff]
  %v654 = vld [vmem:[%s1 + $0xe0] sm:$0xff]
  %v655 = vld [vmem:[%s1 + $0xe8] sm:$0xff]
  %v656 = vld [vmem:[%s1 + $0xf0] sm:$0xff]
  %v657 = vld [vmem:[%s1 + $0xf8] sm:$0xff]
  %v658 = vld [vmem:[%s2] sm:$0xff]
  %v659 = vld [vmem:[%s2 + $0x8] sm:$0xff]
  %v660 = vld [vmem:[%s2 + $0x10] sm:$0xff]
  %v661 = vld [vmem:[%s2 + $0x18] sm:$0xff]
  %v662 = vld [vmem:[%s2 + $0x20] sm:$0xff]
  %v663 = vld [vmem:[%s2 + $0x28] sm:$0xff]
  %v664 = vld [vmem:[%s2 + $0x30] sm:$0xff]
  %v665 = vld [vmem:[%s2 + $0x38] sm:$0xff]
  %v666 = vld [vmem:[%s2 + $0x40] sm:$0xff]
  %v667 = vld [vmem:[%s2 + $0x48] sm:$0xff]
  %v668 = vld [vmem:[%s2 + $0x50] sm:$0xff]
  %v669 = vld [vmem:[%s2 + $0x58] sm:$0xff]
  %v670 = vld [vmem:[%s2 + $0x60] sm:$0xff]
  %v671 = vld [vmem:[%s2 + $0x68] sm:$0xff]
  %v672 = vld [vmem:[%s2 + $0x70] sm:$0xff]
  %v673 = vld [vmem:[%s2 + $0x78] sm:$0xff]
  %675 = vset.pattern.permute.xlu0 0
  %676 = vperm.xlu0 %675, %v658
  %v677 = vpop.permute.xlu0 %676
  %680 = vset.pattern.permute.xlu0 0
  %681 = vperm.xlu0 %680, %v659
  %v682 = vpop.permute.xlu0 %681
  %685 = vset.pattern.permute.xlu0 0
  %686 = vperm.xlu0 %685, %v660
  %v687 = vpop.permute.xlu0 %686
  %690 = vset.pattern.permute.xlu0 0
  %691 = vperm.xlu0 %690, %v661
  %v692 = vpop.permute.xlu0 %691
  %695 = vset.pattern.permute.xlu0 0
  %696 = vperm.xlu0 %695, %v662
  %v697 = vpop.permute.xlu0 %696
  %700 = vset.pattern.permute.xlu0 0
  %701 = vperm.xlu0 %700, %v663
  %v702 = vpop.permute.xlu0 %701
  %705 = vset.pattern.permute.xlu0 0
  %706 = vperm.xlu0 %705, %v664
  %v707 = vpop.permute.xlu0 %706
  %710 = vset.pattern.permute.xlu0 0
  %711 = vperm.xlu0 %710, %v665
  %v712 = vpop.permute.xlu0 %711
  %715 = vset.pattern.permute.xlu0 0
  %716 = vperm.xlu0 %715, %v666
  %v717 = vpop.permute.xlu0 %716
  %720 = vset.pattern.permute.xlu0 0
  %721 = vperm.xlu0 %720, %v667
  %v722 = vpop.permute.xlu0 %721
  %725 = vset.pattern.permute.xlu0 0
  %726 = vperm.xlu0 %725, %v668
  %v727 = vpop.permute.xlu0 %726
  %730 = vset.pattern.permute.xlu0 0
  %731 = vperm.xlu0 %730, %v669
  %v732 = vpop.permute.xlu0 %731
  %735 = vset.pattern.permute.xlu0 0
  %736 = vperm.xlu0 %735, %v670
  %v737 = vpop.permute.xlu0 %736
  %740 = vset.pattern.permute.xlu0 0
  %741 = vperm.xlu0 %740, %v671
  %v742 = vpop.permute.xlu0 %741
  %745 = vset.pattern.permute.xlu0 0
  %746 = vperm.xlu0 %745, %v672
  %v747 = vpop.permute.xlu0 %746
  %750 = vset.pattern.permute.xlu0 0
  %751 = vperm.xlu0 %750, %v673
  %v752 = vpop.permute.xlu0 %751
  %v755 = vsel %vm184, %v627, 0
  %v758 = vsel %vm184, %v629, 0
  %v761 = vsel %vm184, %v631, 0
  %v764 = vsel %vm184, %v633, 0
  %v767 = vsel %vm184, %v635, 0
  %v770 = vsel %vm184, %v637, 0
  %v773 = vsel %vm184, %v639, 0
  %v776 = vsel %vm184, %v641, 0
  %v779 = vsel %vm184, %v643, 0
  %v782 = vsel %vm184, %v645, 0
  %v785 = vsel %vm184, %v647, 0
  %v788 = vsel %vm184, %v649, 0
  %v791 = vsel %vm184, %v651, 0
  %v794 = vsel %vm184, %v653, 0
  %v797 = vsel %vm184, %v655, 0
  %v800 = vsel %vm184, %v657, 0
  %802 = vmatpush.msra.mxu0 %v620
  %803 = vmatpush.msra.mxu0 %v618
  %804 = vmatpush.msra.mxu0 %v616
  %805 = vmatpush.msra.mxu0 %v614
  %806 = vmatpush.msra.mxu0 %v612
  %807 = vmatpush.msra.mxu0 %v610
  %808 = vmatpush.msra.mxu0 %v608
  %809 = vmatpush.msra.mxu0 %v606
  %810 = vmatpush.msra.mxu0 %v604
  %811 = vmatpush.msra.mxu0 %v602
  %812 = vmatpush.msra.mxu0 %v600
  %813 = vmatpush.msra.mxu0 %v598
  %814 = vmatpush.msra.mxu0 %v596
  %815 = vmatpush.msra.mxu0 %v594
  %816 = vmatpush.msra.mxu0 %v592
  %817 = vmatpush.msra.mxu0 %v590
  %818 = vmatmul.f32.gmra.mxu0 %v626
  %v819 = vpop.f32.mrf.mxu0
  %v820 = vadd.f32 %v677, %v819
  %821 = vmatmul.f32.gmra.mxu0 %v628
  %v822 = vpop.f32.mrf.mxu0
  %v823 = vadd.f32 %v682, %v822
  %824 = vmatmul.f32.gmra.mxu0 %v630
  %v825 = vpop.f32.mrf.mxu0
  %v826 = vadd.f32 %v687, %v825
  %827 = vmatmul.f32.gmra.mxu0 %v632
  %v828 = vpop.f32.mrf.mxu0
  %v829 = vadd.f32 %v692, %v828
  %830 = vmatmul.f32.gmra.mxu0 %v634
  %v831 = vpop.f32.mrf.mxu0
  %v832 = vadd.f32 %v697, %v831
  %833 = vmatmul.f32.gmra.mxu0 %v636
  %v834 = vpop.f32.mrf.mxu0
  %v835 = vadd.f32 %v702, %v834
  %836 = vmatmul.f32.gmra.mxu0 %v638
  %v837 = vpop.f32.mrf.mxu0
  %v838 = vadd.f32 %v707, %v837
  %839 = vmatmul.f32.gmra.mxu0 %v640
  %v840 = vpop.f32.mrf.mxu0
  %v841 = vadd.f32 %v712, %v840
  %842 = vmatmul.f32.gmra.mxu0 %v642
  %v843 = vpop.f32.mrf.mxu0
  %v844 = vadd.f32 %v717, %v843
  %845 = vmatmul.f32.gmra.mxu0 %v644
  %v846 = vpop.f32.mrf.mxu0
  %v847 = vadd.f32 %v722, %v846
  %848 = vmatmul.f32.gmra.mxu0 %v646
  %v849 = vpop.f32.mrf.mxu0
  %v850 = vadd.f32 %v727, %v849
  %851 = vmatmul.f32.gmra.mxu0 %v648
  %v852 = vpop.f32.mrf.mxu0
  %v853 = vadd.f32 %v732, %v852
  %854 = vmatmul.f32.gmra.mxu0 %v650
  %v855 = vpop.f32.mrf.mxu0
  %v856 = vadd.f32 %v737, %v855
  %857 = vmatmul.f32.gmra.mxu0 %v652
  %v858 = vpop.f32.mrf.mxu0
  %v859 = vadd.f32 %v742, %v858
  %860 = vmatmul.f32.gmra.mxu0 %v654
  %v861 = vpop.f32.mrf.mxu0
  %v862 = vadd.f32 %v747, %v861
  %863 = vmatmul.f32.gmra.mxu0 %v656
  %v864 = vpop.f32.mrf.mxu0
  %v865 = vadd.f32 %v752, %v864
  %866 = vdwg.mxu0
  %867 = vmatpush.msra.mxu0 0.0
  %868 = vmatpush.msra.mxu0 0.0
  %869 = vmatpush.msra.mxu0 0.0
  %870 = vmatpush.msra.mxu0 0.0
  %871 = vmatpush.msra.mxu0 0.0
  %872 = vmatpush.msra.mxu0 0.0
  %873 = vmatpush.msra.mxu0 0.0
  %874 = vmatpush.msra.mxu0 0.0
  %875 = vmatpush.msra.mxu0 0.0
  %876 = vmatpush.msra.mxu0 0.0
  %877 = vmatpush.msra.mxu0 0.0
  %878 = vmatpush.msra.mxu0 0.0
  %879 = vmatpush.msra.mxu0 0.0
  %880 = vmatpush.msra.mxu0 0.0
  %881 = vmatpush.msra.mxu0 %v624
  %882 = vmatpush.msra.mxu0 %v622
  %883 = vmatmul.f32.gmra.mxu0 %v755
  %v884 = vpop.f32.mrf.mxu0
  %v885 = vadd.f32 %v820, %v884
  %886 = vmatmul.f32.gmra.mxu0 %v758
  %v887 = vpop.f32.mrf.mxu0
  %v888 = vadd.f32 %v823, %v887
  %889 = vmatmul.f32.gmra.mxu0 %v761
  %v890 = vpop.f32.mrf.mxu0
  %v891 = vadd.f32 %v826, %v890
  %892 = vmatmul.f32.gmra.mxu0 %v764
  %v893 = vpop.f32.mrf.mxu0
  %v894 = vadd.f32 %v829, %v893
  %895 = vmatmul.f32.gmra.mxu0 %v767
  %v896 = vpop.f32.mrf.mxu0
  %v897 = vadd.f32 %v832, %v896
  %898 = vmatmul.f32.gmra.mxu0 %v770
  %v899 = vpop.f32.mrf.mxu0
  %v900 = vadd.f32 %v835, %v899
  %901 = vmatmul.f32.gmra.mxu0 %v773
  %v902 = vpop.f32.mrf.mxu0
  %v903 = vadd.f32 %v838, %v902
  %904 = vmatmul.f32.gmra.mxu0 %v776
  %v905 = vpop.f32.mrf.mxu0
  %v906 = vadd.f32 %v841, %v905
  %907 = vmatmul.f32.gmra.mxu0 %v779
  %v908 = vpop.f32.mrf.mxu0
  %v909 = vadd.f32 %v844, %v908
  %910 = vmatmul.f32.gmra.mxu0 %v782
  %v911 = vpop.f32.mrf.mxu0
  %v912 = vadd.f32 %v847, %v911
  %913 = vmatmul.f32.gmra.mxu0 %v785
  %v914 = vpop.f32.mrf.mxu0
  %v915 = vadd.f32 %v850, %v914
  %916 = vmatmul.f32.gmra.mxu0 %v788
  %v917 = vpop.f32.mrf.mxu0
  %v918 = vadd.f32 %v853, %v917
  %919 = vmatmul.f32.gmra.mxu0 %v791
  %v920 = vpop.f32.mrf.mxu0
  %v921 = vadd.f32 %v856, %v920
  %922 = vmatmul.f32.gmra.mxu0 %v794
  %v923 = vpop.f32.mrf.mxu0
  %v924 = vadd.f32 %v859, %v923
  %925 = vmatmul.f32.gmra.mxu0 %v797
  %v926 = vpop.f32.mrf.mxu0
  %v927 = vadd.f32 %v862, %v926
  %928 = vmatmul.f32.gmra.mxu0 %v800
  %v929 = vpop.f32.mrf.mxu0
  %v930 = vadd.f32 %v865, %v929
  %931 = vdwg.mxu0
  %932 = vmatpush.msra.mxu0 %v621
  %933 = vmatpush.msra.mxu0 %v619
  %934 = vmatpush.msra.mxu0 %v617
  %935 = vmatpush.msra.mxu0 %v615
  %936 = vmatpush.msra.mxu0 %v613
  %937 = vmatpush.msra.mxu0 %v611
  %938 = vmatpush.msra.mxu0 %v609
  %939 = vmatpush.msra.mxu0 %v607
  %940 = vmatpush.msra.mxu0 %v605
  %941 = vmatpush.msra.mxu0 %v603
  %942 = vmatpush.msra.mxu0 %v601
  %943 = vmatpush.msra.mxu0 %v599
  %944 = vmatpush.msra.mxu0 %v597
  %945 = vmatpush.msra.mxu0 %v595
  %946 = vmatpush.msra.mxu0 %v593
  %947 = vmatpush.msra.mxu0 %v591
  %948 = vmatmul.f32.gmra.mxu0 %v626
  %v949 = vpop.f32.mrf.mxu0
  %v950 = vadd.f32 %v677, %v949
  %951 = vmatmul.f32.gmra.mxu0 %v628
  %v952 = vpop.f32.mrf.mxu0
  %v953 = vadd.f32 %v682, %v952
  %954 = vmatmul.f32.gmra.mxu0 %v630
  %v955 = vpop.f32.mrf.mxu0
  %v956 = vadd.f32 %v687, %v955
  %957 = vmatmul.f32.gmra.mxu0 %v632
  %v958 = vpop.f32.mrf.mxu0
  %v959 = vadd.f32 %v692, %v958
  %960 = vmatmul.f32.gmra.mxu0 %v634
  %v961 = vpop.f32.mrf.mxu0
  %v962 = vadd.f32 %v697, %v961
  %963 = vmatmul.f32.gmra.mxu0 %v636
  %v964 = vpop.f32.mrf.mxu0
  %v965 = vadd.f32 %v702, %v964
  %966 = vmatmul.f32.gmra.mxu0 %v638
  %v967 = vpop.f32.mrf.mxu0
  %v968 = vadd.f32 %v707, %v967
  %969 = vmatmul.f32.gmra.mxu0 %v640
  %v970 = vpop.f32.mrf.mxu0
  %v971 = vadd.f32 %v712, %v970
  %972 = vmatmul.f32.gmra.mxu0 %v642
  %v973 = vpop.f32.mrf.mxu0
  %v974 = vadd.f32 %v717, %v973
  %975 = vmatmul.f32.gmra.mxu0 %v644
  %v976 = vpop.f32.mrf.mxu0
  %v977 = vadd.f32 %v722, %v976
  %978 = vmatmul.f32.gmra.mxu0 %v646
  %v979 = vpop.f32.mrf.mxu0
  %v980 = vadd.f32 %v727, %v979
  %981 = vmatmul.f32.gmra.mxu0 %v648
  %v982 = vpop.f32.mrf.mxu0
  %v983 = vadd.f32 %v732, %v982
  %984 = vmatmul.f32.gmra.mxu0 %v650
  %v985 = vpop.f32.mrf.mxu0
  %v986 = vadd.f32 %v737, %v985
  %987 = vmatmul.f32.gmra.mxu0 %v652
  %v988 = vpop.f32.mrf.mxu0
  %v989 = vadd.f32 %v742, %v988
  %990 = vmatmul.f32.gmra.mxu0 %v654
  %v991 = vpop.f32.mrf.mxu0
  %v992 = vadd.f32 %v747, %v991
  %993 = vmatmul.f32.gmra.mxu0 %v656
  %v994 = vpop.f32.mrf.mxu0
  %v995 = vadd.f32 %v752, %v994
  %996 = vdwg.mxu0
  %997 = vmatpush.msra.mxu0 0.0
  %998 = vmatpush.msra.mxu0 0.0
  %999 = vmatpush.msra.mxu0 0.0
  %1000 = vmatpush.msra.mxu0 0.0
  %1001 = vmatpush.msra.mxu0 0.0
  %1002 = vmatpush.msra.mxu0 0.0
  %1003 = vmatpush.msra.mxu0 0.0
  %1004 = vmatpush.msra.mxu0 0.0
  %1005 = vmatpush.msra.mxu0 0.0
  %1006 = vmatpush.msra.mxu0 0.0
  %1007 = vmatpush.msra.mxu0 0.0
  %1008 = vmatpush.msra.mxu0 0.0
  %1009 = vmatpush.msra.mxu0 0.0
  %1010 = vmatpush.msra.mxu0 0.0
  %1011 = vmatpush.msra.mxu0 %v625
  %1012 = vmatpush.msra.mxu0 %v623
  %1013 = vmatmul.f32.gmra.mxu0 %v755
  %v1014 = vpop.f32.mrf.mxu0
  %v1015 = vadd.f32 %v950, %v1014
  %1016 = vmatmul.f32.gmra.mxu0 %v758
  %v1017 = vpop.f32.mrf.mxu0
  %v1018 = vadd.f32 %v953, %v1017
  %1019 = vmatmul.f32.gmra.mxu0 %v761
  %v1020 = vpop.f32.mrf.mxu0
  %v1021 = vadd.f32 %v956, %v1020
  %1022 = vmatmul.f32.gmra.mxu0 %v764
  %v1023 = vpop.f32.mrf.mxu0
  %v1024 = vadd.f32 %v959, %v1023
  %1025 = vmatmul.f32.gmra.mxu0 %v767
  %v1026 = vpop.f32.mrf.mxu0
  %v1027 = vadd.f32 %v962, %v1026
  %1028 = vmatmul.f32.gmra.mxu0 %v770
  %v1029 = vpop.f32.mrf.mxu0
  %v1030 = vadd.f32 %v965, %v1029
  %1031 = vmatmul.f32.gmra.mxu0 %v773
  %v1032 = vpop.f32.mrf.mxu0
  %v1033 = vadd.f32 %v968, %v1032
  %1034 = vmatmul.f32.gmra.mxu0 %v776
  %v1035 = vpop.f32.mrf.mxu0
  %v1036 = vadd.f32 %v971, %v1035
  %1037 = vmatmul.f32.gmra.mxu0 %v779
  %v1038 = vpop.f32.mrf.mxu0
  %v1039 = vadd.f32 %v974, %v1038
  %1040 = vmatmul.f32.gmra.mxu0 %v782
  %v1041 = vpop.f32.mrf.mxu0
  %v1042 = vadd.f32 %v977, %v1041
  %1043 = vmatmul.f32.gmra.mxu0 %v785
  %v1044 = vpop.f32.mrf.mxu0
  %v1045 = vadd.f32 %v980, %v1044
  %1046 = vmatmul.f32.gmra.mxu0 %v788
  %v1047 = vpop.f32.mrf.mxu0
  %v1048 = vadd.f32 %v983, %v1047
  %1049 = vmatmul.f32.gmra.mxu0 %v791
  %v1050 = vpop.f32.mrf.mxu0
  %v1051 = vadd.f32 %v986, %v1050
  %1052 = vmatmul.f32.gmra.mxu0 %v794
  %v1053 = vpop.f32.mrf.mxu0
  %v1054 = vadd.f32 %v989, %v1053
  %1055 = vmatmul.f32.gmra.mxu0 %v797
  %v1056 = vpop.f32.mrf.mxu0
  %v1057 = vadd.f32 %v992, %v1056
  %1058 = vmatmul.f32.gmra.mxu0 %v800
  %v1059 = vpop.f32.mrf.mxu0
  %v1060 = vadd.f32 %v995, %v1059
  %1061 = vdwg.mxu0
  %v1062 = vmax.f32 %v885, 0.0
  %v1063 = vmax.f32 %v1015, 0.0
  %v1064 = vmax.f32 %v888, 0.0
  %v1065 = vmax.f32 %v1018, 0.0
  %v1066 = vmax.f32 %v891, 0.0
  %v1067 = vmax.f32 %v1021, 0.0
  %v1068 = vmax.f32 %v894, 0.0
  %v1069 = vmax.f32 %v1024, 0.0
  %v1070 = vmax.f32 %v897, 0.0
  %v1071 = vmax.f32 %v1027, 0.0
  %v1072 = vmax.f32 %v900, 0.0
  %v1073 = vmax.f32 %v1030, 0.0
  %v1074 = vmax.f32 %v903, 0.0
  %v1075 = vmax.f32 %v1033, 0.0
  %v1076 = vmax.f32 %v906, 0.0
  %v1077 = vmax.f32 %v1036, 0.0
  %v1078 = vmax.f32 %v909, 0.0
  %v1079 = vmax.f32 %v1039, 0.0
  %v1080 = vmax.f32 %v912, 0.0
  %v1081 = vmax.f32 %v1042, 0.0
  %v1082 = vmax.f32 %v915, 0.0
  %v1083 = vmax.f32 %v1045, 0.0
  %v1084 = vmax.f32 %v918, 0.0
  %v1085 = vmax.f32 %v1048, 0.0
  %v1086 = vmax.f32 %v921, 0.0
  %v1087 = vmax.f32 %v1051, 0.0
  %v1088 = vmax.f32 %v924, 0.0
  %v1089 = vmax.f32 %v1054, 0.0
  %v1090 = vmax.f32 %v927, 0.0
  %v1091 = vmax.f32 %v1057, 0.0
  %v1092 = vmax.f32 %v930, 0.0
  %v1093 = vmax.f32 %v1060, 0.0
  %v1094 = vld [vmem:[%s3] sm:$0xff]
  %v1095 = vld [vmem:[%s3 + $0x8] sm:$0xf]
  %v1096 = vld [vmem:[%s4] sm:$0xff]
  %v1097 = vld [vmem:[%s4 + $0x8] sm:$0xf]
  %1099 = vset.pattern.permute.xlu0 0
  %1100 = vperm.xlu0 %1099, %v1096
  %v1101 = vpop.permute.xlu0 %1100
  %1104 = vset.pattern.permute.xlu0 0
  %1105 = vperm.xlu0 %1104, %v1097
  %v1106 = vpop.permute.xlu0 %1105
  %1108 = vmatpush.msra.mxu0 %v1092
  %1109 = vmatpush.msra.mxu0 %v1090
  %1110 = vmatpush.msra.mxu0 %v1088
  %1111 = vmatpush.msra.mxu0 %v1086
  %1112 = vmatpush.msra.mxu0 %v1084
  %1113 = vmatpush.msra.mxu0 %v1082
  %1114 = vmatpush.msra.mxu0 %v1080
  %1115 = vmatpush.msra.mxu0 %v1078
  %1116 = vmatpush.msra.mxu0 %v1076
  %1117 = vmatpush.msra.mxu0 %v1074
  %1118 = vmatpush.msra.mxu0 %v1072
  %1119 = vmatpush.msra.mxu0 %v1070
  %1120 = vmatpush.msra.mxu0 %v1068
  %1121 = vmatpush.msra.mxu0 %v1066
  %1122 = vmatpush.msra.mxu0 %v1064
  %1123 = vmatpush.msra.mxu0 %v1062
  %1124 = vmatmul.f32.gmra.mxu0 %v1094
  %v1125 = vpop.f32.mrf.mxu0
  %v1126 = vadd.f32 %v1101, %v1125
  %1127 = vmatmul.f32.gmra.mxu0 %v1095
  %v1128 = vpop.f32.mrf.mxu0
  %v1129 = vadd.f32 %v1106, %v1128
  %1130 = vdwg.mxu0
  %1131 = vmatpush.msra.mxu0 %v1093
  %1132 = vmatpush.msra.mxu0 %v1091
  %1133 = vmatpush.msra.mxu0 %v1089
  %1134 = vmatpush.msra.mxu0 %v1087
  %1135 = vmatpush.msra.mxu0 %v1085
  %1136 = vmatpush.msra.mxu0 %v1083
  %1137 = vmatpush.msra.mxu0 %v1081
  %1138 = vmatpush.msra.mxu0 %v1079
  %1139 = vmatpush.msra.mxu0 %v1077
  %1140 = vmatpush.msra.mxu0 %v1075
  %1141 = vmatpush.msra.mxu0 %v1073
  %1142 = vmatpush.msra.mxu0 %v1071
  %1143 = vmatpush.msra.mxu0 %v1069
  %1144 = vmatpush.msra.mxu0 %v1067
  %1145 = vmatpush.msra.mxu0 %v1065
  %1146 = vmatpush.msra.mxu0 %v1063
  %1147 = vmatmul.f32.gmra.mxu0 %v1094
  %v1148 = vpop.f32.mrf.mxu0
  %v1149 = vadd.f32 %v1101, %v1148
  %1150 = vmatmul.f32.gmra.mxu0 %v1095
  %v1151 = vpop.f32.mrf.mxu0
  %v1152 = vadd.f32 %v1106, %v1151
  %1153 = vdwg.mxu0
  %s1154 = scalar_lea.vmem %s5, 32
  %1155 = vst [vmem:[%s1154] sm:$0xff] %v1126
  %1156 = vst [vmem:[%s1154 + $0x8] sm:$0xff] %v1149
  %1157 = vst [vmem:[%s1154 + $0x10] sm:$0xf] %v1129
  %1158 = vst [vmem:[%s1154 + $0x18] sm:$0xf] %v1152
  // Predicated region
  $region22: #{convolution_op.1} parent=0 // pred_check
    _
  $region23: #{convolution_op.1} parent=0 // pred_check_branch
    %1160 = sbr.rel (0) target = $region25
  $region24: #{convolution_op.1} parent=0 // pred_region
    _
  $region25: #{convolution_op.1} parent=0 // pred_fallthru
    _
  // Predicated region
  $region26: #{convolution_op.1} parent=0 // pred_check
    _
  $region27: #{convolution_op.1} parent=0 // pred_check_branch
    %1162 = sbr.rel (0) target = $region29
  $region28: #{convolution_op.1} parent=0 // pred_region
    _
  $region29: #{convolution_op.1} parent=0 // pred_fallthru
    _

</llo_original>
